<compile_context>
chip_gen: v7x
topology: tpu7x:2x2x1
jax: 0.10.0
libtpu: 0.0.40
codegen_flags: <defaults>
</compile_context>

<pallas_src>
import math

import jax
import jax.numpy as jnp
from jax.experimental import pallas as pl
from jax.experimental.pallas import tpu as pltpu


# Matmul operand dtype. bf16 -> 2-4.7x MXU rate + half the weight/activation traffic.
# Use jnp.float32 for strict parity with the f32 PyTorch reference.
MATMUL_DTYPE = jnp.bfloat16

# Conservative scoped-VMEM request: fits under v7x's 64 MiB physical VMEM and well under
# v5e/v6e's 128 MiB, while being far above the defaults (16/32 MiB).
_VMEM_LIMIT_BYTES = 48 * 1024 * 1024

_LN_EPS = 1e-5


def _compiler_params(dimension_semantics):
    return pltpu.CompilerParams(dimension_semantics=dimension_semantics,
                                vmem_limit_bytes=_VMEM_LIMIT_BYTES)


# ----------------------------------------------------------------------------
# Tiling helpers
# ----------------------------------------------------------------------------

def _row_tiling(M, max_bm=256):
    """Return (padded_M, block_m): block_m divides padded_M, padded_M >= M."""
    if M <= max_bm:
        return M, M
    for bm in (256, 128, 64, 32, 16, 8):
        if M % bm == 0:
            return M, bm
    bm = 128
    return pl.cdiv(M, bm) * bm, bm          # pad rows instead of one giant block


def _red_tiling(K, max_tk=512):
    """Reduction-axis tile: >=128 (lane aligned) divisor, else the full extent."""
    if K <= max_tk:
        return K
    for tk in (512, 256, 128):
        if K % tk == 0:
            return tk
    return K


def _seq_tiling(L, max_t=256):
    if L <= max_t:
        return L
    for t in (256, 128, 64, 32, 16, 8):
        if L % t == 0:
            return t
    return L


def _pad_rows(a, target, axis=0):
    cur = a.shape[axis]
    if cur == target:
        return a
    pads = [(0, 0)] * a.ndim
    pads[axis] = (0, target - cur)
    return jnp.pad(a, pads)


# ----------------------------------------------------------------------------
# Kernel 1: fused multi-output projection, head-major outputs
#   out_i[h, m, :] = (x @ w_i + b_i)[m, h*d_i:(h+1)*d_i]
# Grid: (row tiles [parallel], K tiles [arbitrary reduction]) with f32 accumulators.
# ----------------------------------------------------------------------------

def _head_projection(x_flat, ws, bs, heads, dims):
    M, K = x_flat.shape
    n = len(ws)
    Mp, bm = _row_tiling(M)
    tk = _red_tiling(K)
    xp = _pad_rows(x_flat, Mp)

    def kernel(*refs):
        x_ref = refs[0]
        w_refs = refs[1:1 + n]
        b_refs = refs[1 + n:1 + 2 * n]
        o_refs = refs[1 + 2 * n:1 + 3 * n]
        acc_refs = refs[1 + 3 * n:1 + 4 * n]
        k = pl.program_id(1)

        @pl.when(k == 0)
        def _():
            for acc in acc_refs:
                acc[...] = jnp.zeros_like(acc)

        xb = x_ref[...].astype(MATMUL_DTYPE)
        for w_ref, acc in zip(w_refs, acc_refs):
            acc[...] += jnp.dot(xb, w_ref[...], preferred_element_type=jnp.float32)

        @pl.when(k == pl.num_programs(1) - 1)
        def _():
            for o_ref, acc, b_ref, nh, d in zip(o_refs, acc_refs, b_refs, heads, dims):
                val = acc[...] + b_ref[...]
                for hh in range(nh):                        # once per row-tile (epilogue only)
                    o_ref[hh, :, :] = val[:, hh * d:(hh + 1) * d].astype(o_ref.dtype)

    in_specs = [pl.BlockSpec((bm, tk), lambda i, k: (i, k))]
    in_specs += [pl.BlockSpec((tk, w.shape[1]), lambda i, k: (k, 0)) for w in ws]
    in_specs += [pl.BlockSpec((1, b.shape[1]), lambda i, k: (0, 0)) for b in bs]

    out_shape = tuple(jax.ShapeDtypeStruct((nh, Mp, d), MATMUL_DTYPE)
                      for nh, d in zip(heads, dims))
    out_specs = tuple(pl.BlockSpec((nh, bm, d), lambda i, k: (0, i, 0))
                      for nh, d in zip(heads, dims))
    scratch = [pltpu.VMEM((bm, nh * d), jnp.float32) for nh, d in zip(heads, dims)]

    outs = pl.pallas_call(
        kernel,
        out_shape=out_shape,
        grid=(Mp // bm, K // tk),
        in_specs=in_specs,
        out_specs=out_specs,
        scratch_shapes=scratch,
        compiler_params=_compiler_params(("parallel", "arbitrary")),
    )(xp, *ws, *bs)
    if not isinstance(outs, (list, tuple)):
        outs = (outs,)
    return [o[:, :M, :] for o in outs]


# ----------------------------------------------------------------------------
# Kernel 2: scaled dot-product attention, grid = (B, n_head, Lq tiles), all parallel.
# Q already pre-scaled by 1/sqrt(d_k); mask is int8 (nonzero = masked out).
# ----------------------------------------------------------------------------

def _attention(q_hm, k_hm, v_hm, mask_i8):
    n_head, B, Lq, d_k = q_hm.shape
    Lk = k_hm.shape[2]
    d_v = v_hm.shape[3]
    tq = _seq_tiling(Lq)

    def kernel(q_ref, k_ref, v_ref, m_ref, ctx_ref, attn_ref):
        q = q_ref[0, 0]                                       # (tq, d_k)
        k = k_ref[0, 0]                                       # (Lk, d_k)
        s = jax.lax.dot_general(q, k, (((1,), (1,)), ((), ())),
                                preferred_element_type=jnp.float32)
        # masked_fill(mask, -inf): large finite negative keeps fully-masked rows NaN-free.
        s = jnp.where(m_ref[0] != 0, -1e30, s)
        s_max = jnp.max(s, axis=-1, keepdims=True)
        e = jnp.exp(s - s_max)
        p = e / jnp.sum(e, axis=-1, keepdims=True)            # exact softmax (f32)
        attn_ref[0, 0] = p
        ctx = jnp.dot(p.astype(MATMUL_DTYPE), v_ref[0, 0],
                      preferred_element_type=jnp.float32)
        ctx_ref[0, 0] = ctx.astype(ctx_ref.dtype)

    ctx, attn = pl.pallas_call(
        kernel,
        out_shape=(
            jax.ShapeDtypeStruct((n_head, B, Lq, d_v), MATMUL_DTYPE),
            jax.ShapeDtypeStruct((n_head, B, Lq, Lk), jnp.float32),
        ),
        grid=(B, n_head, Lq // tq),
        in_specs=[
            pl.BlockSpec((1, 1, tq, d_k), lambda b, h, qi: (h, b, qi, 0)),
            pl.BlockSpec((1, 1, Lk, d_k), lambda b, h, qi: (h, b, 0, 0)),
            pl.BlockSpec((1, 1, Lk, d_v), lambda b, h, qi: (h, b, 0, 0)),
            pl.BlockSpec((1, tq, Lk), lambda b, h, qi: (b, qi, 0)),   # int8 mask
        ],
        out_specs=(
            pl.BlockSpec((1, 1, tq, d_v), lambda b, h, qi: (h, b, qi, 0)),
            pl.BlockSpec((1, 1, tq, Lk), lambda b, h, qi: (h, b, qi, 0)),
        ),
        compiler_params=_compiler_params(("parallel", "parallel", "parallel")),
    )(q_hm, k_hm, v_hm, mask_i8)
    return ctx, attn


# ----------------------------------------------------------------------------
# Kernel 3: MHA epilogue — fc projection (reduction over heads) + residual + LN + npm.
#   out = LayerNorm(sum_h ctx_h @ w_fc[h] + b_fc + residual) * npm
# ----------------------------------------------------------------------------

def _attn_out_proj(ctx_hm, w_fc_h, b_fc, residual, gamma, beta, npm):
    n_head, M, d_v = ctx_hm.shape
    D = residual.shape[1]
    Mp, bm = _row_tiling(M)
    ctxp = _pad_rows(ctx_hm, Mp, axis=1)
    rp = _pad_rows(residual, Mp)
    npmp = _pad_rows(npm, Mp)

    def kernel(ctx_ref, w_ref, b_ref, r_ref, g_ref, be_ref, n_ref, o_ref, acc_ref):
        h = pl.program_id(1)

        @pl.when(h == 0)
        def _():
            acc_ref[...] = r_ref[...] + b_ref[...]

        acc_ref[...] += jnp.dot(ctx_ref[0], w_ref[0], preferred_element_type=jnp.float32)

        @pl.when(h == pl.num_programs(1) - 1)
        def _():
            y = acc_ref[...]
            mean = jnp.mean(y, axis=-1, keepdims=True)
            var = jnp.mean((y - mean) ** 2, axis=-1, keepdims=True)
            norm = (y - mean) * jax.lax.rsqrt(var + _LN_EPS)
            o_ref[...] = (norm * g_ref[...] + be_ref[...]) * n_ref[...]

    out = pl.pallas_call(
        kernel,
        out_shape=jax.ShapeDtypeStruct((Mp, D), jnp.float32),
        grid=(Mp // bm, n_head),
        in_specs=[
            pl.BlockSpec((1, bm, d_v), lambda i, h: (h, i, 0)),
            pl.BlockSpec((1, d_v, D), lambda i, h: (h, 0, 0)),
            pl.BlockSpec((1, D), lambda i, h: (0, 0)),
            pl.BlockSpec((bm, D), lambda i, h: (i, 0)),
            pl.BlockSpec((1, D), lambda i, h: (0, 0)),
            pl.BlockSpec((1, D), lambda i, h: (0, 0)),
            pl.BlockSpec((bm, 1), lambda i, h: (i, 0)),
        ],
        out_specs=pl.BlockSpec((bm, D), lambda i, h: (i, 0)),
        scratch_shapes=[pltpu.VMEM((bm, D), jnp.float32)],
        compiler_params=_compiler_params(("parallel", "arbitrary")),
    )(ctxp, w_fc_h, b_fc, rp, gamma, beta, npmp)
    return out[:M]


# ----------------------------------------------------------------------------
# Kernel 4: position-wise FFN — matmul->relu->matmul (hidden dim streamed as a
# reduction grid axis) + residual + LN + npm.
# ----------------------------------------------------------------------------

def _ffn(x_flat, w1, b1, w2, b2, gamma, beta, npm):
    M, D = x_flat.shape
    H = w1.shape[1]
    Mp, bm = _row_tiling(M)
    th = _red_tiling(H)
    xp = _pad_rows(x_flat, Mp)
    npmp = _pad_rows(npm, Mp)

    def kernel(x_ref, w1_ref, b1_ref, w2_ref, b2_ref, g_ref, be_ref, n_ref, o_ref, acc_ref):
        j = pl.program_id(1)

        @pl.when(j == 0)
        def _():
            acc_ref[...] = x_ref[...] + b2_ref[...]          # residual + output bias

        xb = x_ref[...].astype(MATMUL_DTYPE)
        h = jnp.dot(xb, w1_ref[...], preferred_element_type=jnp.float32) + b1_ref[...]
        h = jnp.maximum(h, 0.0)
        acc_ref[...] += jnp.dot(h.astype(MATMUL_DTYPE), w2_ref[...],
                                preferred_element_type=jnp.float32)

        @pl.when(j == pl.num_programs(1) - 1)
        def _():
            y = acc_ref[...]
            mean = jnp.mean(y, axis=-1, keepdims=True)
            var = jnp.mean((y - mean) ** 2, axis=-1, keepdims=True)
            norm = (y - mean) * jax.lax.rsqrt(var + _LN_EPS)
            o_ref[...] = (norm * g_ref[...] + be_ref[...]) * n_ref[...]

    out = pl.pallas_call(
        kernel,
        out_shape=jax.ShapeDtypeStruct((Mp, D), jnp.float32),
        grid=(Mp // bm, H // th),
        in_specs=[
            pl.BlockSpec((bm, D), lambda i, j: (i, 0)),
            pl.BlockSpec((D, th), lambda i, j: (0, j)),
            pl.BlockSpec((1, th), lambda i, j: (0, j)),
            pl.BlockSpec((th, D), lambda i, j: (j, 0)),
            pl.BlockSpec((1, D), lambda i, j: (0, 0)),
            pl.BlockSpec((1, D), lambda i, j: (0, 0)),
            pl.BlockSpec((1, D), lambda i, j: (0, 0)),
            pl.BlockSpec((bm, 1), lambda i, j: (i, 0)),
        ],
        out_specs=pl.BlockSpec((bm, D), lambda i, j: (i, 0)),
        scratch_shapes=[pltpu.VMEM((bm, D), jnp.float32)],
        compiler_params=_compiler_params(("parallel", "arbitrary")),
    )(xp, w1, b1, w2, b2, gamma, beta, npmp)
    return out[:M]


# ----------------------------------------------------------------------------
# Module glue (only free reshapes stay in plain JAX)
# ----------------------------------------------------------------------------

def multi_head_attention(q_in, kv_in, mask, npm, p, *, self_attn):
    B, Lq, D = q_in.shape
    Lk = kv_in.shape[1]
    n_head, d_k, d_v = p["n_head"], p["d_k"], p["d_v"]
    M = B * Lq
    q_flat = q_in.reshape(M, D)

    if self_attn:
        # Fused Q/K/V projection: x read once, three head-major outputs.
        q_h, k_h, v_h = _head_projection(
            q_flat, [p["w_q"], p["w_k"], p["w_v"]], [p["b_q"], p["b_k"], p["b_v"]],
            [n_head, n_head, n_head], [d_k, d_k, d_v])
    else:
        (q_h,) = _head_projection(q_flat, [p["w_q"]], [p["b_q"]], [n_head], [d_k])
        kv_flat = kv_in.reshape(B * Lk, D)
        k_h, v_h = _head_projection(
            kv_flat, [p["w_k"], p["w_v"]], [p["b_k"], p["b_v"]],
            [n_head, n_head], [d_k, d_v])

    q_hm = q_h.reshape(n_head, B, Lq, d_k)        # contiguous reshapes, no copies
    k_hm = k_h.reshape(n_head, B, Lk, d_k)
    v_hm = v_h.reshape(n_head, B, Lk, d_v)

    mask_i8 = (mask != 0).astype(jnp.int8)
    ctx_hm, attn = _attention(q_hm, k_hm, v_hm, mask_i8)

    out = _attn_out_proj(ctx_hm.reshape(n_head, M, d_v), p["w_fc_h"], p["b_fc"],
                         q_flat, p["ln_g"], p["ln_b"], npm)
    return out.reshape(B, Lq, D), attn.reshape(n_head * B, Lq, Lk)


def positionwise_ffn(x, npm, p):
    B, L, D = x.shape
    out = _ffn(x.reshape(B * L, D), p["w1"], p["b1"], p["w2"], p["b2"],
               p["ln_g"], p["ln_b"], npm)
    return out.reshape(B, L, D)


def decoder_layer(dec_input, enc_output, non_pad_mask, slf_attn_mask,
                  dec_enc_attn_mask, params):
    B, L, D = dec_input.shape
    npm = non_pad_mask.reshape(B * L, 1).astype(jnp.float32)

    dec_output, dec_slf_attn = multi_head_attention(
        dec_input, dec_input, slf_attn_mask, npm, params["slf_attn"], self_attn=True)

    dec_output, dec_enc_attn = multi_head_attention(
        dec_output, enc_output, dec_enc_attn_mask, npm, params["enc_attn"], self_attn=False)

    dec_output = positionwise_ffn(dec_output, npm, params["pos_ffn"])
    return dec_output, dec_slf_attn, dec_enc_attn


# ----------------------------------------------------------------------------
# Parameter init (f32, PyTorch-like) + one-time prepare (fold scale, cast, reshape)
# ----------------------------------------------------------------------------

def init_mha_params(key, d_model, n_head, d_k, d_v):
    ks = jax.random.split(key, 4)
    std_qk = math.sqrt(2.0 / (d_model + d_k))
    std_v = math.sqrt(2.0 / (d_model + d_v))
    return {
        "w_qs": jax.random.normal(ks[0], (d_model, n_head * d_k), jnp.float32) * std_qk,
        "b_qs": jnp.zeros((1, n_head * d_k), jnp.float32),
        "w_ks": jax.random.normal(ks[1], (d_model, n_head * d_k), jnp.float32) * std_qk,
        "b_ks": jnp.zeros((1, n_head * d_k), jnp.float32),
        "w_vs": jax.random.normal(ks[2], (d_model, n_head * d_v), jnp.float32) * std_v,
        "b_vs": jnp.zeros((1, n_head * d_v), jnp.float32),
        "w_fc": (jax.random.normal(ks[3], (n_head * d_v, d_model), jnp.float32)
                 * math.sqrt(2.0 / (n_head * d_v + d_model))),
        "b_fc": jnp.zeros((1, d_model), jnp.float32),
        "ln_g": jnp.ones((1, d_model), jnp.float32),
        "ln_b": jnp.zeros((1, d_model), jnp.float32),
    }


def init_ffn_params(key, d_model, d_inner):
    k1, k2 = jax.random.split(key, 2)
    return {
        "w1": jax.random.normal(k1, (d_model, d_inner), jnp.float32) * math.sqrt(1.0 / d_model),
        "b1": jnp.zeros((1, d_inner), jnp.float32),
        "w2": jax.random.normal(k2, (d_inner, d_model), jnp.float32) * math.sqrt(1.0 / d_inner),
        "b2": jnp.zeros((1, d_model), jnp.float32),
        "ln_g": jnp.ones((1, d_model), jnp.float32),
        "ln_b": jnp.zeros((1, d_model), jnp.float32),
    }


def prepare_decoder_params(raw, n_head, d_k, d_v):
    """One-time prep: fold 1/sqrt(d_k) into Q, cast weights to MATMUL_DTYPE, reshape
    fc weight to head-major (n_head, d_v, d_model). No per-call concatenation needed."""
    inv_temp = 1.0 / math.sqrt(d_k)

    def prep_mha(p):
        return {
            "n_head": n_head, "d_k": d_k, "d_v": d_v,
            "w_q": (p["w_qs"] * inv_temp).astype(MATMUL_DTYPE),
            "b_q": p["b_qs"] * inv_temp,
            "w_k": p["w_ks"].astype(MATMUL_DTYPE), "b_k": p["b_ks"],
            "w_v": p["w_vs"].astype(MATMUL_DTYPE), "b_v": p["b_vs"],
            "w_fc_h": p["w_fc"].reshape(n_head, d_v, -1).astype(MATMUL_DTYPE),
            "b_fc": p["b_fc"],
            "ln_g": p["ln_g"], "ln_b": p["ln_b"],
        }

    def prep_ffn(p):
        return {"w1": p["w1"].astype(MATMUL_DTYPE), "b1": p["b1"],
                "w2": p["w2"].astype(MATMUL_DTYPE), "b2": p["b2"],
                "ln_g": p["ln_g"], "ln_b": p["ln_b"]}

    return {"slf_attn": prep_mha(raw["slf_attn"]),
            "enc_attn": prep_mha(raw["enc_attn"]),
            "pos_ffn": prep_ffn(raw["pos_ffn"])}


# ----------------------------------------------------------------------------
# Demo
# ----------------------------------------------------------------------------

if __name__ == "__main__":
    B, L, d_model, d_inner = 2, 8, 32, 64
    n_head, d_k, d_v = 4, 8, 8

    root = jax.random.PRNGKey(0)
    k_in, k_enc, k_p1, k_p2, k_p3 = jax.random.split(root, 5)

    dec_input = jax.random.normal(k_in, (B, L, d_model), jnp.float32)
    enc_output = jax.random.normal(k_enc, (B, L, d_model), jnp.float32)

    # non_pad_mask: (B, L, 1), 1 = real token, 0 = pad (last two tokens of batch 1 padded)
    non_pad = jnp.ones((B, L), jnp.float32).at[1, -2:].set(0.0)
    non_pad_mask = non_pad[:, :, None]
    # self-attention mask: causal (nonzero above the diagonal == masked)
    causal = jnp.triu(jnp.ones((L, L), jnp.float32), k=1)
    slf_attn_mask = jnp.broadcast_to(causal, (B, L, L))
    # decoder-encoder attention mask: no masking
    dec_enc_attn_mask = jnp.zeros((B, L, L), jnp.float32)

    raw_params = {
        "slf_attn": init_mha_params(k_p1, d_model, n_head, d_k, d_v),
        "enc_attn": init_mha_params(k_p2, d_model, n_head, d_k, d_v),
        "pos_ffn": init_ffn_params(k_p3, d_model, d_inner),
    }
    params = prepare_decoder_params(raw_params, n_head, d_k, d_v)

    dec_out, slf_attn, enc_attn = decoder_layer(
        dec_input, enc_output, non_pad_mask, slf_attn_mask, dec_enc_attn_mask, params)

    jax.block_until_ready((dec_out, slf_attn, enc_attn))
    assert dec_out.shape == (B, L, d_model)
    assert slf_attn.shape == (n_head * B, L, L)
    assert enc_attn.shape == (n_head * B, L, L)
    assert bool(jnp.all(jnp.isfinite(dec_out)))
    assert bool(jnp.allclose(jnp.sum(slf_attn, axis=-1), 1.0, atol=1e-3))
    print("KERNEL_OK")
</pallas_src>

<mosaic_0001>
module attributes {stable_mosaic.version = 11 : i64} {
  func.func @kernel(%arg0: i32, %arg1: i32, %arg2: memref<16x32xf32, #tpu.memory_space<vmem>>, %arg3: memref<32x32xbf16, #tpu.memory_space<vmem>>, %arg4: memref<32x32xbf16, #tpu.memory_space<vmem>>, %arg5: memref<32x32xbf16, #tpu.memory_space<vmem>>, %arg6: memref<1x32xf32, #tpu.memory_space<vmem>>, %arg7: memref<1x32xf32, #tpu.memory_space<vmem>>, %arg8: memref<1x32xf32, #tpu.memory_space<vmem>>, %arg9: memref<4x16x8xbf16, #tpu.memory_space<vmem>>, %arg10: memref<4x16x8xbf16, #tpu.memory_space<vmem>>, %arg11: memref<4x16x8xbf16, #tpu.memory_space<vmem>>, %arg12: memref<16x32xf32, #tpu.memory_space<vmem>>, %arg13: memref<16x32xf32, #tpu.memory_space<vmem>>, %arg14: memref<16x32xf32, #tpu.memory_space<vmem>>) attributes {dimension_semantics = [#tpu.dimension_semantics<parallel>, #tpu.dimension_semantics<arbitrary>], iteration_bounds = array<i64: 1, 1>, scalar_prefetch = 0 : i64, scratch_operands = 3 : i64, tpu.core_type = #tpu.core_type<tc>, window_params = [{transform_indices = @transform_0, window_bounds = array<i64: 16, 32>}, {transform_indices = @transform_1, window_bounds = array<i64: 32, 32>}, {transform_indices = @transform_2, window_bounds = array<i64: 32, 32>}, {transform_indices = @transform_3, window_bounds = array<i64: 32, 32>}, {pipeline_mode = #tpu.pipeline_mode<synchronous>, transform_indices = @transform_4, window_bounds = array<i64: 1, 32>}, {pipeline_mode = #tpu.pipeline_mode<synchronous>, transform_indices = @transform_5, window_bounds = array<i64: 1, 32>}, {pipeline_mode = #tpu.pipeline_mode<synchronous>, transform_indices = @transform_6, window_bounds = array<i64: 1, 32>}, {transform_indices = @transform_7, window_bounds = array<i64: 4, 16, 8>}, {transform_indices = @transform_8, window_bounds = array<i64: 4, 16, 8>}, {transform_indices = @transform_9, window_bounds = array<i64: 4, 16, 8>}]} {
    %c0_i32 = arith.constant 0 : i32
    %0 = arith.cmpi eq, %arg1, %c0_i32 : i32
    %1 = arith.extui %0 : i1 to i32
    %c0_i32_0 = arith.constant 0 : i32
    %2 = arith.cmpi ne, %1, %c0_i32_0 : i32
    scf.if %2 {
      %cst_24 = arith.constant 0.000000e+00 : f32
      %23 = vector.broadcast %cst_24 : f32 to vector<16x32xf32>
      %c0_25 = arith.constant 0 : index
      %c0_26 = arith.constant 0 : index
      %24 = vector.load %arg12[%c0_25, %c0_26] : memref<16x32xf32, #tpu.memory_space<vmem>>, vector<16x32xf32>
      tpu.vector_store %arg12[%c0_25, %c0_26], %23 {strides = array<i32>} : memref<16x32xf32, #tpu.memory_space<vmem>>, vector<16x32xf32>,
      %cst_27 = arith.constant 0.000000e+00 : f32
      %25 = vector.broadcast %cst_27 : f32 to vector<16x32xf32>
      %c0_28 = arith.constant 0 : index
      %c0_29 = arith.constant 0 : index
      %26 = vector.load %arg13[%c0_28, %c0_29] : memref<16x32xf32, #tpu.memory_space<vmem>>, vector<16x32xf32>
      tpu.vector_store %arg13[%c0_28, %c0_29], %25 {strides = array<i32>} : memref<16x32xf32, #tpu.memory_space<vmem>>, vector<16x32xf32>,
      %cst_30 = arith.constant 0.000000e+00 : f32
      %27 = vector.broadcast %cst_30 : f32 to vector<16x32xf32>
      %c0_31 = arith.constant 0 : index
      %c0_32 = arith.constant 0 : index
      %28 = vector.load %arg14[%c0_31, %c0_32] : memref<16x32xf32, #tpu.memory_space<vmem>>, vector<16x32xf32>
      tpu.vector_store %arg14[%c0_31, %c0_32], %27 {strides = array<i32>} : memref<16x32xf32, #tpu.memory_space<vmem>>, vector<16x32xf32>,
    } else {
    }
    %c0 = arith.constant 0 : index
    %c0_1 = arith.constant 0 : index
    %3 = vector.load %arg2[%c0, %c0_1] : memref<16x32xf32, #tpu.memory_space<vmem>>, vector<16x32xf32>
    %4 = arith.truncf %3 : vector<16x32xf32> to vector<16x32xbf16>
    %c0_2 = arith.constant 0 : index
    %c0_3 = arith.constant 0 : index
    %5 = vector.load %arg12[%c0_2, %c0_3] : memref<16x32xf32, #tpu.memory_space<vmem>>, vector<16x32xf32>
    %c0_4 = arith.constant 0 : index
    %c0_5 = arith.constant 0 : index
    %6 = vector.load %arg3[%c0_4, %c0_5] : memref<32x32xbf16, #tpu.memory_space<vmem>>, vector<32x32xbf16>
    %cst = arith.constant dense<0.000000e+00> : vector<16x32xf32>
    %7 = tpu.matmul %4, %6, %cst {dimension_numbers = #tpu.dot_dimension_numbers<[1], [0], [0], [1], [0, 0, 1, 1], [], []>} : vector<16x32xbf16>, vector<32x32xbf16>, vector<16x32xf32> -> vector<16x32xf32>
    %8 = arith.addf %5, %7 : vector<16x32xf32>
    %c0_6 = arith.constant 0 : index
    %c0_7 = arith.constant 0 : index
    %9 = vector.load %arg12[%c0_6, %c0_7] : memref<16x32xf32, #tpu.memory_space<vmem>>, vector<16x32xf32>
    tpu.vector_store %arg12[%c0_6, %c0_7], %8 {strides = array<i32>} : memref<16x32xf32, #tpu.memory_space<vmem>>, vector<16x32xf32>,
    %c0_8 = arith.constant 0 : index
    %c0_9 = arith.constant 0 : index
    %10 = vector.load %arg13[%c0_8, %c0_9] : memref<16x32xf32, #tpu.memory_space<vmem>>, vector<16x32xf32>
    %c0_10 = arith.constant 0 : index
    %c0_11 = arith.constant 0 : index
    %11 = vector.load %arg4[%c0_10, %c0_11] : memref<32x32xbf16, #tpu.memory_space<vmem>>, vector<32x32xbf16>
    %cst_12 = arith.constant dense<0.000000e+00> : vector<16x32xf32>
    %12 = tpu.matmul %4, %11, %cst_12 {dimension_numbers = #tpu.dot_dimension_numbers<[1], [0], [0], [1], [0, 0, 1, 1], [], []>} : vector<16x32xbf16>, vector<32x32xbf16>, vector<16x32xf32> -> vector<16x32xf32>
    %13 = arith.addf %10, %12 : vector<16x32xf32>
    %c0_13 = arith.constant 0 : index
    %c0_14 = arith.constant 0 : index
    %14 = vector.load %arg13[%c0_13, %c0_14] : memref<16x32xf32, #tpu.memory_space<vmem>>, vector<16x32xf32>
    tpu.vector_store %arg13[%c0_13, %c0_14], %13 {strides = array<i32>} : memref<16x32xf32, #tpu.memory_space<vmem>>, vector<16x32xf32>,
    %c0_15 = arith.constant 0 : index
    %c0_16 = arith.constant 0 : index
    %15 = vector.load %arg14[%c0_15, %c0_16] : memref<16x32xf32, #tpu.memory_space<vmem>>, vector<16x32xf32>
    %c0_17 = arith.constant 0 : index
    %c0_18 = arith.constant 0 : index
    %16 = vector.load %arg5[%c0_17, %c0_18] : memref<32x32xbf16, #tpu.memory_space<vmem>>, vector<32x32xbf16>
    %cst_19 = arith.constant dense<0.000000e+00> : vector<16x32xf32>
    %17 = tpu.matmul %4, %16, %cst_19 {dimension_numbers = #tpu.dot_dimension_numbers<[1], [0], [0], [1], [0, 0, 1, 1], [], []>} : vector<16x32xbf16>, vector<32x32xbf16>, vector<16x32xf32> -> vector<16x32xf32>
    %18 = arith.addf %15, %17 : vector<16x32xf32>
    %c0_20 = arith.constant 0 : index
    %c0_21 = arith.constant 0 : index
    %19 = vector.load %arg14[%c0_20, %c0_21] : memref<16x32xf32, #tpu.memory_space<vmem>>, vector<16x32xf32>
    tpu.vector_store %arg14[%c0_20, %c0_21], %18 {strides = array<i32>} : memref<16x32xf32, #tpu.memory_space<vmem>>, vector<16x32xf32>,
    %c0_i32_22 = arith.constant 0 : i32
    %20 = arith.cmpi eq, %arg1, %c0_i32_22 : i32
    %21 = arith.extui %20 : i1 to i32
    %c0_i32_23 = arith.constant 0 : i32
    %22 = arith.cmpi ne, %21, %c0_i32_23 : i32
    scf.if %22 {
      %c0_24 = arith.constant 0 : index
      %c0_25 = arith.constant 0 : index
      %23 = vector.load %arg12[%c0_24, %c0_25] : memref<16x32xf32, #tpu.memory_space<vmem>>, vector<16x32xf32>
      %c0_26 = arith.constant 0 : index
      %c0_27 = arith.constant 0 : index
      %24 = vector.load %arg6[%c0_26, %c0_27] : memref<1x32xf32, #tpu.memory_space<vmem>>, vector<1x32xf32>
      %25 = vector.broadcast %24 : vector<1x32xf32> to vector<16x32xf32>
      %26 = arith.addf %23, %25 : vector<16x32xf32>
      %27 = vector.extract_strided_slice %26 {offsets = [0, 0], sizes = [16, 8], strides = [1, 1]} : vector<16x32xf32> to vector<16x8xf32>
      %28 = arith.truncf %27 : vector<16x8xf32> to vector<16x8xbf16>
      %c0_28 = arith.constant 0 : index
      %c0_29 = arith.constant 0 : index
      %c0_30 = arith.constant 0 : index
      %29 = vector.load %arg9[%c0_28, %c0_29, %c0_30] : memref<4x16x8xbf16, #tpu.memory_space<vmem>>, vector<1x16x8xbf16>
      %30 = vector.shape_cast %29 : vector<1x16x8xbf16> to vector<16x8xbf16>
      %31 = vector.shape_cast %28 : vector<16x8xbf16> to vector<1x16x8xbf16>
      tpu.vector_store %arg9[%c0_28, %c0_29, %c0_30], %31 {strides = array<i32>} : memref<4x16x8xbf16, #tpu.memory_space<vmem>>, vector<1x16x8xbf16>,
      %32 = vector.extract_strided_slice %26 {offsets = [0, 8], sizes = [16, 8], strides = [1, 1]} : vector<16x32xf32> to vector<16x8xf32>
      %33 = arith.truncf %32 : vector<16x8xf32> to vector<16x8xbf16>
      %c1 = arith.constant 1 : index
      %c0_31 = arith.constant 0 : index
      %c0_32 = arith.constant 0 : index
      %34 = vector.load %arg9[%c1, %c0_31, %c0_32] : memref<4x16x8xbf16, #tpu.memory_space<vmem>>, vector<1x16x8xbf16>
      %35 = vector.shape_cast %34 : vector<1x16x8xbf16> to vector<16x8xbf16>
      %36 = vector.shape_cast %33 : vector<16x8xbf16> to vector<1x16x8xbf16>
      tpu.vector_store %arg9[%c1, %c0_31, %c0_32], %36 {strides = array<i32>} : memref<4x16x8xbf16, #tpu.memory_space<vmem>>, vector<1x16x8xbf16>,
      %37 = vector.extract_strided_slice %26 {offsets = [0, 16], sizes = [16, 8], strides = [1, 1]} : vector<16x32xf32> to vector<16x8xf32>
      %38 = arith.truncf %37 : vector<16x8xf32> to vector<16x8xbf16>
      %c2 = arith.constant 2 : index
      %c0_33 = arith.constant 0 : index
      %c0_34 = arith.constant 0 : index
      %39 = vector.load %arg9[%c2, %c0_33, %c0_34] : memref<4x16x8xbf16, #tpu.memory_space<vmem>>, vector<1x16x8xbf16>
      %40 = vector.shape_cast %39 : vector<1x16x8xbf16> to vector<16x8xbf16>
      %41 = vector.shape_cast %38 : vector<16x8xbf16> to vector<1x16x8xbf16>
      tpu.vector_store %arg9[%c2, %c0_33, %c0_34], %41 {strides = array<i32>} : memref<4x16x8xbf16, #tpu.memory_space<vmem>>, vector<1x16x8xbf16>,
      %42 = vector.extract_strided_slice %26 {offsets = [0, 24], sizes = [16, 8], strides = [1, 1]} : vector<16x32xf32> to vector<16x8xf32>
      %43 = arith.truncf %42 : vector<16x8xf32> to vector<16x8xbf16>
      %c3 = arith.constant 3 : index
      %c0_35 = arith.constant 0 : index
      %c0_36 = arith.constant 0 : index
      %44 = vector.load %arg9[%c3, %c0_35, %c0_36] : memref<4x16x8xbf16, #tpu.memory_space<vmem>>, vector<1x16x8xbf16>
      %45 = vector.shape_cast %44 : vector<1x16x8xbf16> to vector<16x8xbf16>
      %46 = vector.shape_cast %43 : vector<16x8xbf16> to vector<1x16x8xbf16>
      tpu.vector_store %arg9[%c3, %c0_35, %c0_36], %46 {strides = array<i32>} : memref<4x16x8xbf16, #tpu.memory_space<vmem>>, vector<1x16x8xbf16>,
      %c0_37 = arith.constant 0 : index
      %c0_38 = arith.constant 0 : index
      %47 = vector.load %arg13[%c0_37, %c0_38] : memref<16x32xf32, #tpu.memory_space<vmem>>, vector<16x32xf32>
      %c0_39 = arith.constant 0 : index
      %c0_40 = arith.constant 0 : index
      %48 = vector.load %arg7[%c0_39, %c0_40] : memref<1x32xf32, #tpu.memory_space<vmem>>, vector<1x32xf32>
      %49 = vector.broadcast %48 : vector<1x32xf32> to vector<16x32xf32>
      %50 = arith.addf %47, %49 : vector<16x32xf32>
      %51 = vector.extract_strided_slice %50 {offsets = [0, 0], sizes = [16, 8], strides = [1, 1]} : vector<16x32xf32> to vector<16x8xf32>
      %52 = arith.truncf %51 : vector<16x8xf32> to vector<16x8xbf16>
      %c0_41 = arith.constant 0 : index
      %c0_42 = arith.constant 0 : index
      %c0_43 = arith.constant 0 : index
      %53 = vector.load %arg10[%c0_41, %c0_42, %c0_43] : memref<4x16x8xbf16, #tpu.memory_space<vmem>>, vector<1x16x8xbf16>
      %54 = vector.shape_cast %53 : vector<1x16x8xbf16> to vector<16x8xbf16>
      %55 = vector.shape_cast %52 : vector<16x8xbf16> to vector<1x16x8xbf16>
      tpu.vector_store %arg10[%c0_41, %c0_42, %c0_43], %55 {strides = array<i32>} : memref<4x16x8xbf16, #tpu.memory_space<vmem>>, vector<1x16x8xbf16>,
      %56 = vector.extract_strided_slice %50 {offsets = [0, 8], sizes = [16, 8], strides = [1, 1]} : vector<16x32xf32> to vector<16x8xf32>
      %57 = arith.truncf %56 : vector<16x8xf32> to vector<16x8xbf16>
      %c1_44 = arith.constant 1 : index
      %c0_45 = arith.constant 0 : index
      %c0_46 = arith.constant 0 : index
      %58 = vector.load %arg10[%c1_44, %c0_45, %c0_46] : memref<4x16x8xbf16, #tpu.memory_space<vmem>>, vector<1x16x8xbf16>
      %59 = vector.shape_cast %58 : vector<1x16x8xbf16> to vector<16x8xbf16>
      %60 = vector.shape_cast %57 : vector<16x8xbf16> to vector<1x16x8xbf16>
      tpu.vector_store %arg10[%c1_44, %c0_45, %c0_46], %60 {strides = array<i32>} : memref<4x16x8xbf16, #tpu.memory_space<vmem>>, vector<1x16x8xbf16>,
      %61 = vector.extract_strided_slice %50 {offsets = [0, 16], sizes = [16, 8], strides = [1, 1]} : vector<16x32xf32> to vector<16x8xf32>
      %62 = arith.truncf %61 : vector<16x8xf32> to vector<16x8xbf16>
      %c2_47 = arith.constant 2 : index
      %c0_48 = arith.constant 0 : index
      %c0_49 = arith.constant 0 : index
      %63 = vector.load %arg10[%c2_47, %c0_48, %c0_49] : memref<4x16x8xbf16, #tpu.memory_space<vmem>>, vector<1x16x8xbf16>
      %64 = vector.shape_cast %63 : vector<1x16x8xbf16> to vector<16x8xbf16>
      %65 = vector.shape_cast %62 : vector<16x8xbf16> to vector<1x16x8xbf16>
      tpu.vector_store %arg10[%c2_47, %c0_48, %c0_49], %65 {strides = array<i32>} : memref<4x16x8xbf16, #tpu.memory_space<vmem>>, vector<1x16x8xbf16>,
      %66 = vector.extract_strided_slice %50 {offsets = [0, 24], sizes = [16, 8], strides = [1, 1]} : vector<16x32xf32> to vector<16x8xf32>
      %67 = arith.truncf %66 : vector<16x8xf32> to vector<16x8xbf16>
      %c3_50 = arith.constant 3 : index
      %c0_51 = arith.constant 0 : index
      %c0_52 = arith.constant 0 : index
      %68 = vector.load %arg10[%c3_50, %c0_51, %c0_52] : memref<4x16x8xbf16, #tpu.memory_space<vmem>>, vector<1x16x8xbf16>
      %69 = vector.shape_cast %68 : vector<1x16x8xbf16> to vector<16x8xbf16>
      %70 = vector.shape_cast %67 : vector<16x8xbf16> to vector<1x16x8xbf16>
      tpu.vector_store %arg10[%c3_50, %c0_51, %c0_52], %70 {strides = array<i32>} : memref<4x16x8xbf16, #tpu.memory_space<vmem>>, vector<1x16x8xbf16>,
      %c0_53 = arith.constant 0 : index
      %c0_54 = arith.constant 0 : index
      %71 = vector.load %arg14[%c0_53, %c0_54] : memref<16x32xf32, #tpu.memory_space<vmem>>, vector<16x32xf32>
      %c0_55 = arith.constant 0 : index
      %c0_56 = arith.constant 0 : index
      %72 = vector.load %arg8[%c0_55, %c0_56] : memref<1x32xf32, #tpu.memory_space<vmem>>, vector<1x32xf32>
      %73 = vector.broadcast %72 : vector<1x32xf32> to vector<16x32xf32>
      %74 = arith.addf %71, %73 : vector<16x32xf32>
      %75 = vector.extract_strided_slice %74 {offsets = [0, 0], sizes = [16, 8], strides = [1, 1]} : vector<16x32xf32> to vector<16x8xf32>
      %76 = arith.truncf %75 : vector<16x8xf32> to vector<16x8xbf16>
      %c0_57 = arith.constant 0 : index
      %c0_58 = arith.constant 0 : index
      %c0_59 = arith.constant 0 : index
      %77 = vector.load %arg11[%c0_57, %c0_58, %c0_59] : memref<4x16x8xbf16, #tpu.memory_space<vmem>>, vector<1x16x8xbf16>
      %78 = vector.shape_cast %77 : vector<1x16x8xbf16> to vector<16x8xbf16>
      %79 = vector.shape_cast %76 : vector<16x8xbf16> to vector<1x16x8xbf16>
      tpu.vector_store %arg11[%c0_57, %c0_58, %c0_59], %79 {strides = array<i32>} : memref<4x16x8xbf16, #tpu.memory_space<vmem>>, vector<1x16x8xbf16>,
      %80 = vector.extract_strided_slice %74 {offsets = [0, 8], sizes = [16, 8], strides = [1, 1]} : vector<16x32xf32> to vector<16x8xf32>
      %81 = arith.truncf %80 : vector<16x8xf32> to vector<16x8xbf16>
      %c1_60 = arith.constant 1 : index
      %c0_61 = arith.constant 0 : index
      %c0_62 = arith.constant 0 : index
      %82 = vector.load %arg11[%c1_60, %c0_61, %c0_62] : memref<4x16x8xbf16, #tpu.memory_space<vmem>>, vector<1x16x8xbf16>
      %83 = vector.shape_cast %82 : vector<1x16x8xbf16> to vector<16x8xbf16>
      %84 = vector.shape_cast %81 : vector<16x8xbf16> to vector<1x16x8xbf16>
      tpu.vector_store %arg11[%c1_60, %c0_61, %c0_62], %84 {strides = array<i32>} : memref<4x16x8xbf16, #tpu.memory_space<vmem>>, vector<1x16x8xbf16>,
      %85 = vector.extract_strided_slice %74 {offsets = [0, 16], sizes = [16, 8], strides = [1, 1]} : vector<16x32xf32> to vector<16x8xf32>
      %86 = arith.truncf %85 : vector<16x8xf32> to vector<16x8xbf16>
      %c2_63 = arith.constant 2 : index
      %c0_64 = arith.constant 0 : index
      %c0_65 = arith.constant 0 : index
      %87 = vector.load %arg11[%c2_63, %c0_64, %c0_65] : memref<4x16x8xbf16, #tpu.memory_space<vmem>>, vector<1x16x8xbf16>
      %88 = vector.shape_cast %87 : vector<1x16x8xbf16> to vector<16x8xbf16>
      %89 = vector.shape_cast %86 : vector<16x8xbf16> to vector<1x16x8xbf16>
      tpu.vector_store %arg11[%c2_63, %c0_64, %c0_65], %89 {strides = array<i32>} : memref<4x16x8xbf16, #tpu.memory_space<vmem>>, vector<1x16x8xbf16>,
      %90 = vector.extract_strided_slice %74 {offsets = [0, 24], sizes = [16, 8], strides = [1, 1]} : vector<16x32xf32> to vector<16x8xf32>
      %91 = arith.truncf %90 : vector<16x8xf32> to vector<16x8xbf16>
      %c3_66 = arith.constant 3 : index
      %c0_67 = arith.constant 0 : index
      %c0_68 = arith.constant 0 : index
      %92 = vector.load %arg11[%c3_66, %c0_67, %c0_68] : memref<4x16x8xbf16, #tpu.memory_space<vmem>>, vector<1x16x8xbf16>
      %93 = vector.shape_cast %92 : vector<1x16x8xbf16> to vector<16x8xbf16>
      %94 = vector.shape_cast %91 : vector<16x8xbf16> to vector<1x16x8xbf16>
      tpu.vector_store %arg11[%c3_66, %c0_67, %c0_68], %94 {strides = array<i32>} : memref<4x16x8xbf16, #tpu.memory_space<vmem>>, vector<1x16x8xbf16>,
    } else {
    }
    return
  }
  func.func @transform_0(%arg0: i32, %arg1: i32) -> (i32, i32) {
    %c0_i32 = arith.constant 0 : i32
    return %arg0, %arg1 : i32, i32
  }
  func.func @transform_1(%arg0: i32, %arg1: i32) -> (i32, i32) {
    %c0_i32 = arith.constant 0 : i32
    %c0_i32_0 = arith.constant 0 : i32
    return %arg1, %c0_i32 : i32, i32
  }
  func.func @transform_2(%arg0: i32, %arg1: i32) -> (i32, i32) {
    %c0_i32 = arith.constant 0 : i32
    %c0_i32_0 = arith.constant 0 : i32
    return %arg1, %c0_i32 : i32, i32
  }
  func.func @transform_3(%arg0: i32, %arg1: i32) -> (i32, i32) {
    %c0_i32 = arith.constant 0 : i32
    %c0_i32_0 = arith.constant 0 : i32
    return %arg1, %c0_i32 : i32, i32
  }
  func.func @transform_4(%arg0: i32, %arg1: i32) -> (i32, i32) {
    %c0_i32 = arith.constant 0 : i32
    %c0_i32_0 = arith.constant 0 : i32
    %c0_i32_1 = arith.constant 0 : i32
    return %c0_i32, %c0_i32_0 : i32, i32
  }
  func.func @transform_5(%arg0: i32, %arg1: i32) -> (i32, i32) {
    %c0_i32 = arith.constant 0 : i32
    %c0_i32_0 = arith.constant 0 : i32
    %c0_i32_1 = arith.constant 0 : i32
    return %c0_i32, %c0_i32_0 : i32, i32
  }
  func.func @transform_6(%arg0: i32, %arg1: i32) -> (i32, i32) {
    %c0_i32 = arith.constant 0 : i32
    %c0_i32_0 = arith.constant 0 : i32
    %c0_i32_1 = arith.constant 0 : i32
    return %c0_i32, %c0_i32_0 : i32, i32
  }
  func.func @transform_7(%arg0: i32, %arg1: i32) -> (i32, i32, i32) {
    %c0_i32 = arith.constant 0 : i32
    %c0_i32_0 = arith.constant 0 : i32
    %c0_i32_1 = arith.constant 0 : i32
    return %c0_i32, %arg0, %c0_i32_0 : i32, i32, i32
  }
  func.func @transform_8(%arg0: i32, %arg1: i32) -> (i32, i32, i32) {
    %c0_i32 = arith.constant 0 : i32
    %c0_i32_0 = arith.constant 0 : i32
    %c0_i32_1 = arith.constant 0 : i32
    return %c0_i32, %arg0, %c0_i32_0 : i32, i32, i32
  }
  func.func @transform_9(%arg0: i32, %arg1: i32) -> (i32, i32, i32) {
    %c0_i32 = arith.constant 0 : i32
    %c0_i32_0 = arith.constant 0 : i32
    %c0_i32_1 = arith.constant 0 : i32
    return %c0_i32, %arg0, %c0_i32_0 : i32, i32, i32
  }
}

</mosaic_0001>

<llo_original>
// kernel: tpu_custom_call.1
$region0: #{tpu_custom_call.1}
  #allocation0 [shape = 'u32[]', space=smem, size = 0x4, offset = 0x4, fixed_abs, tag = 'smem constant byte address 0x4 - core index']
  #allocation1 [shape = 'u32[144,128]{1,0:T(1,128)}', space=vmem, size = 0x12000, scoped, tag = 'internal scratch']
  #allocation2 [shape = 'f32[16,32]{1,0:T(8,128)}', space=vmem, size = 0x2000, scoped, tag = 'scratch operand']
  #allocation3 [shape = 'f32[16,32]{1,0:T(8,128)}', space=vmem, size = 0x2000, scoped, tag = 'scratch operand']
  #allocation4 [shape = 'f32[16,32]{1,0:T(8,128)}', space=vmem, size = 0x2000, scoped, tag = 'scratch operand']
  %s0 = inlined_call_operand.hbm [shape: f32[16,32], index: 0, kind: input, shape index: {}]
  %s1 = inlined_call_operand.hbm [shape: bf16[32,32], index: 1, kind: input, shape index: {}]
  %s2 = inlined_call_operand.hbm [shape: bf16[32,32], index: 2, kind: input, shape index: {}]
  %s3 = inlined_call_operand.hbm [shape: bf16[32,32], index: 3, kind: input, shape index: {}]
  %s4 = inlined_call_operand.vmem [shape: f32[1,32], index: 4, kind: input, shape index: {}]
  %s5 = inlined_call_operand.vmem [shape: f32[1,32], index: 5, kind: input, shape index: {}]
  %s6 = inlined_call_operand.vmem [shape: f32[1,32], index: 6, kind: input, shape index: {}]
  %s7 = inlined_call_operand.vmem [shape: bf16[4,16,8], index: 7, kind: output, shape index: {0}]
  %s8 = inlined_call_operand.vmem [shape: bf16[4,16,8], index: 8, kind: output, shape index: {1}]
  %s9 = inlined_call_operand.vmem [shape: bf16[4,16,8], index: 9, kind: output, shape index: {2}]
  %10 = xla_tuple %s7, %s8, %s9
  %s11 = sld [smem:[#allocation0]]
  $region78: #{tpu_custom_call.1} parent=0
    _
  %s13 = ssub.s32 1, %s11
  %s14 = scalar_select 0, %s13, %s11
  $region1: #{tpu_custom_call.1} parent=0
    #allocation5 [shape = 'u8[8192]{0}', space=vmem, size = 0x2000, scoped, tag = 'input window, operand 0, single buffered']
    #allocation6 [shape = 's32[1]{0}', space=sflag, size = 0x4, scoped, tag = 'scoped memory for tpu_custom_call.1']
    #allocation7 [shape = 'u8[8192]{0}', space=vmem, size = 0x2000, scoped, tag = 'input window, operand 1, single buffered']
    #allocation8 [shape = 's32[1]{0}', space=sflag, size = 0x4, scoped, tag = 'scoped memory for tpu_custom_call.1']
    #allocation9 [shape = 'u8[8192]{0}', space=vmem, size = 0x2000, scoped, tag = 'input window, operand 2, single buffered']
    #allocation10 [shape = 'u8[8192]{0}', space=vmem, size = 0x2000, scoped, tag = 'input window, operand 3, single buffered']
    #allocation11 [shape = 's32[1]{0}', space=sflag, size = 0x4, scoped, tag = 'scoped memory for tpu_custom_call.1']
    %15 = vsyncpa [#allocation6], 0
    %16 = vsyncpa [#allocation8], 0
    %17 = vsyncpa [#allocation11], 0
    // Predicated region
    $region2: #{tpu_custom_call.1} parent=1 // pred_check
      _
    $region3: #{tpu_custom_call.1} parent=1 // pred_check_branch
      %19 = sbr.rel (0) target = $region5
    $region4: #{tpu_custom_call.1} parent=1 // pred_region
      %s21 = ssub.s32 256, 256
      %22 = vsyncadd [#allocation6], %s21
      %s23 = sshll.u32 [#allocation5], 4
      %s24 = int_to_ptr.vmem [resolvable:$true] %s23
      %29 = dma.hbm_to_vmem [thread:$0]  %s0, 256, %s24, [#allocation6], 128, 128, 8
    $region5: #{tpu_custom_call.1} parent=1 // pred_fallthru
      _
    // Predicated region
    $region6: #{tpu_custom_call.1} parent=1 // pred_check
      _
    $region7: #{tpu_custom_call.1} parent=1 // pred_check_branch
      %31 = sbr.rel (0) target = $region9
    $region8: #{tpu_custom_call.1} parent=1 // pred_region
      %s33 = ssub.s32 256, 256
      %34 = vsyncadd [#allocation8], %s33
      %s35 = sshll.u32 [#allocation7], 4
      %s36 = int_to_ptr.vmem [resolvable:$true] %s35
      %41 = dma.hbm_to_vmem [thread:$0]  %s1, 256, %s36, [#allocation8], 64, 64, 4
    $region9: #{tpu_custom_call.1} parent=1 // pred_fallthru
      _
    // Predicated region
    $region10: #{tpu_custom_call.1} parent=1 // pred_check
      _
    $region11: #{tpu_custom_call.1} parent=1 // pred_check_branch
      %43 = sbr.rel (0) target = $region13
    $region12: #{tpu_custom_call.1} parent=1 // pred_region
      %s45 = ssub.s32 256, 256
      %46 = vsyncadd [#allocation8], %s45
      %s47 = sshll.u32 [#allocation9], 4
      %s48 = int_to_ptr.vmem [resolvable:$true] %s47
      %53 = dma.hbm_to_vmem [thread:$0]  %s2, 256, %s48, [#allocation8], 64, 64, 4
    $region13: #{tpu_custom_call.1} parent=1 // pred_fallthru
      _
    // Predicated region
    $region14: #{tpu_custom_call.1} parent=1 // pred_check
      _
    $region15: #{tpu_custom_call.1} parent=1 // pred_check_branch
      %55 = sbr.rel (0) target = $region17
    $region16: #{tpu_custom_call.1} parent=1 // pred_region
      %s57 = ssub.s32 256, 256
      %58 = vsyncadd [#allocation11], %s57
      %s59 = sshll.u32 [#allocation10], 4
      %s60 = int_to_ptr.vmem [resolvable:$true] %s59
      %65 = dma.hbm_to_vmem [thread:$0]  %s3, 256, %s60, [#allocation11], 64, 64, 4
    $region17: #{tpu_custom_call.1} parent=1 // pred_fallthru
      _
    // Predicated region
    $region18: #{tpu_custom_call.1} parent=1 // pred_check
      _
    $region19: #{tpu_custom_call.1} parent=1 // pred_check_branch
      %67 = sbr.rel (0) target = $region21
    $region20: #{tpu_custom_call.1} parent=1 // pred_region
      _
    $region21: #{tpu_custom_call.1} parent=1 // pred_fallthru
      _
    // Predicated region
    $region22: #{tpu_custom_call.1} parent=1 // pred_check
      _
    $region23: #{tpu_custom_call.1} parent=1 // pred_check_branch
      %69 = sbr.rel (0) target = $region25
    $region24: #{tpu_custom_call.1} parent=1 // pred_region
      _
    $region25: #{tpu_custom_call.1} parent=1 // pred_fallthru
      _
    // Predicated region
    $region26: #{tpu_custom_call.1} parent=1 // pred_check
      _
    $region27: #{tpu_custom_call.1} parent=1 // pred_check_branch
      %71 = sbr.rel (0) target = $region29
    $region28: #{tpu_custom_call.1} parent=1 // pred_region
      _
    $region29: #{tpu_custom_call.1} parent=1 // pred_fallthru
      _
    // Predicated region
    $region30: #{tpu_custom_call.1} parent=1 // pred_check
      _
    $region31: #{tpu_custom_call.1} parent=1 // pred_check_branch
      %73 = sbr.rel (0) target = $region33
    $region32: #{tpu_custom_call.1} parent=1 // pred_region
      %74 = dma.done [#allocation6], 256
    $region33: #{tpu_custom_call.1} parent=1 // pred_fallthru
      _
    // Predicated region
    $region34: #{tpu_custom_call.1} parent=1 // pred_check
      _
    $region35: #{tpu_custom_call.1} parent=1 // pred_check_branch
      %76 = sbr.rel (0) target = $region37
    $region36: #{tpu_custom_call.1} parent=1 // pred_region
      %77 = dma.done [#allocation8], 256
    $region37: #{tpu_custom_call.1} parent=1 // pred_fallthru
      _
    // Predicated region
    $region38: #{tpu_custom_call.1} parent=1 // pred_check
      _
    $region39: #{tpu_custom_call.1} parent=1 // pred_check_branch
      %79 = sbr.rel (0) target = $region41
    $region40: #{tpu_custom_call.1} parent=1 // pred_region
      %80 = dma.done [#allocation8], 256
    $region41: #{tpu_custom_call.1} parent=1 // pred_fallthru
      _
    // Predicated region
    $region42: #{tpu_custom_call.1} parent=1 // pred_check
      _
    $region43: #{tpu_custom_call.1} parent=1 // pred_check_branch
      %82 = sbr.rel (0) target = $region45
    $region44: #{tpu_custom_call.1} parent=1 // pred_region
      %83 = dma.done [#allocation11], 256
    $region45: #{tpu_custom_call.1} parent=1 // pred_fallthru
      _
    %p85 = scmp.eq.s32.totalorder 0, 0
    // Predicated region
    $region46: #{tpu_custom_call.1} parent=1 // pred_check
      %p86 = pneg %p85
    $region47: #{tpu_custom_call.1} parent=1 // pred_check_branch
      %88 = sbr.rel (%p86) target = $region49
    $region48: #{tpu_custom_call.1} parent=1 // pred_region
      %vm89 = vcmask 261120
      %90 = vst.msk [vmem:[#allocation2] sm:$0xff] %vm89, 0.0
      %91 = vst.msk [vmem:[#allocation2 + $0x8] sm:$0xff] %vm89, 0.0
      %92 = vst.msk [vmem:[#allocation3] sm:$0xff] %vm89, 0.0
      %93 = vst.msk [vmem:[#allocation3 + $0x8] sm:$0xff] %vm89, 0.0
      %94 = vst.msk [vmem:[#allocation4] sm:$0xff] %vm89, 0.0
      %95 = vst.msk [vmem:[#allocation4 + $0x8] sm:$0xff] %vm89, 0.0
    $region49: #{tpu_custom_call.1} parent=1 // pred_fallthru
      _
    %v96 = vld [vmem:[#allocation5] sm:$0xff]
    %v97 = vld [vmem:[#allocation5 + $0x8] sm:$0xff]
    %v98 = vpack.c.bf16 %v97, %v96
    %v99 = vld [vmem:[#allocation2] sm:$0xff]
    %v100 = vld [vmem:[#allocation2 + $0x8] sm:$0xff]
    %v101 = vld [vmem:[#allocation7] sm:$0xf]
    %v102 = vld [vmem:[#allocation7 + $0x4] sm:$0xf]
    %v103 = vld [vmem:[#allocation7 + $0x8] sm:$0xf]
    %v104 = vld [vmem:[#allocation7 + $0xc] sm:$0xf]
    %v109 = vunpack.c.l.b16 %v101
    %v110 = vunpack.c.l.b16 %v102
    %v111 = vunpack.c.l.b16 %v103
    %v112 = vunpack.c.l.b16 %v104
    %v113 = vpack.c.b16 %v110, %v109
    %v114 = vpack.c.b16 %v112, %v111
    %vm117 = vcmask 261120
    %v119 = vsel %vm117, %v98, 0
    %121 = vmatprep.subr.bf16.mxu0 0
    %122 = vmatpush1.bf16.msra.mxu0 %v113
    %123 = vmatprep.subr.bf16.mxu0 0
    %124 = vmatpush1.bf16.msra.mxu0 %v114
    %125 = vmatprep.subr.bf16.mxu0 0
    %126 = vmatpush1.bf16.msra.mxu0 0
    %127 = vmatprep.subr.bf16.mxu0 0
    %128 = vmatpush1.bf16.msra.mxu0 0
    %129 = vmatprep.subr.bf16.mxu0 0
    %130 = vmatpush1.bf16.msra.mxu0 0
    %131 = vmatprep.subr.bf16.mxu0 0
    %132 = vmatpush1.bf16.msra.mxu0 0
    %133 = vmatprep.subr.bf16.mxu0 0
    %134 = vmatpush1.bf16.msra.mxu0 0
    %135 = vmatprep.subr.bf16.mxu0 0
    %136 = vmatpush1.bf16.msra.mxu0 0
    %137 = vmatprep.subr.bf16.mxu0 0
    %138 = vmatpush1.bf16.msra.mxu0 0
    %139 = vmatprep.subr.bf16.mxu0 0
    %140 = vmatpush1.bf16.msra.mxu0 0
    %141 = vmatprep.subr.bf16.mxu0 0
    %142 = vmatpush1.bf16.msra.mxu0 0
    %143 = vmatprep.subr.bf16.mxu0 0
    %144 = vmatpush1.bf16.msra.mxu0 0
    %145 = vmatprep.subr.bf16.mxu0 0
    %146 = vmatpush1.bf16.msra.mxu0 0
    %147 = vmatprep.subr.bf16.mxu0 0
    %148 = vmatpush1.bf16.msra.mxu0 0
    %149 = vmatprep.subr.bf16.mxu0 0
    %150 = vmatpush1.bf16.msra.mxu0 0
    %151 = vmatprep.subr.bf16.mxu0 0
    %152 = vmatpush1.bf16.msra.mxu0 0
    %153 = vmatprep.mubr.bf16.mxu0 0
    %154 = vmatmul.mubr.bf16.gmra.mrb[0].mxu0 %v119
    %v155 = vpop.f32.mrb[0].mxu0
    %v156 = vadd.f32 0.0, %v155
    %v157 = vpop.f32.mrb[0].mxu0
    %v158 = vpop.f32.mrb[0].mxu0
    %v159 = vadd.f32 0.0, %v158
    %v160 = vpop.f32.mrb[0].mxu0
    %161 = vdwg.mxu0
    %v162 = vadd.f32 %v99, %v156
    %v163 = vadd.f32 %v100, %v159
    %164 = vst.msk [vmem:[#allocation2] sm:$0xff] %vm117, %v162
    %165 = vst.msk [vmem:[#allocation2 + $0x8] sm:$0xff] %vm117, %v163
    %v166 = vld [vmem:[#allocation3] sm:$0xff]
    %v167 = vld [vmem:[#allocation3 + $0x8] sm:$0xff]
    %v168 = vld [vmem:[#allocation9] sm:$0xf]
    %v169 = vld [vmem:[#allocation9 + $0x4] sm:$0xf]
    %v170 = vld [vmem:[#allocation9 + $0x8] sm:$0xf]
    %v171 = vld [vmem:[#allocation9 + $0xc] sm:$0xf]
    %v176 = vunpack.c.l.b16 %v168
    %v177 = vunpack.c.l.b16 %v169
    %v178 = vunpack.c.l.b16 %v170
    %v179 = vunpack.c.l.b16 %v171
    %v180 = vpack.c.b16 %v177, %v176
    %v181 = vpack.c.b16 %v179, %v178
    %184 = vmatprep.subr.bf16.mxu0 0
    %185 = vmatpush1.bf16.msra.mxu0 %v180
    %186 = vmatprep.subr.bf16.mxu0 0
    %187 = vmatpush1.bf16.msra.mxu0 %v181
    %188 = vmatprep.subr.bf16.mxu0 0
    %189 = vmatpush1.bf16.msra.mxu0 0
    %190 = vmatprep.subr.bf16.mxu0 0
    %191 = vmatpush1.bf16.msra.mxu0 0
    %192 = vmatprep.subr.bf16.mxu0 0
    %193 = vmatpush1.bf16.msra.mxu0 0
    %194 = vmatprep.subr.bf16.mxu0 0
    %195 = vmatpush1.bf16.msra.mxu0 0
    %196 = vmatprep.subr.bf16.mxu0 0
    %197 = vmatpush1.bf16.msra.mxu0 0
    %198 = vmatprep.subr.bf16.mxu0 0
    %199 = vmatpush1.bf16.msra.mxu0 0
    %200 = vmatprep.subr.bf16.mxu0 0
    %201 = vmatpush1.bf16.msra.mxu0 0
    %202 = vmatprep.subr.bf16.mxu0 0
    %203 = vmatpush1.bf16.msra.mxu0 0
    %204 = vmatprep.subr.bf16.mxu0 0
    %205 = vmatpush1.bf16.msra.mxu0 0
    %206 = vmatprep.subr.bf16.mxu0 0
    %207 = vmatpush1.bf16.msra.mxu0 0
    %208 = vmatprep.subr.bf16.mxu0 0
    %209 = vmatpush1.bf16.msra.mxu0 0
    %210 = vmatprep.subr.bf16.mxu0 0
    %211 = vmatpush1.bf16.msra.mxu0 0
    %212 = vmatprep.subr.bf16.mxu0 0
    %213 = vmatpush1.bf16.msra.mxu0 0
    %214 = vmatprep.subr.bf16.mxu0 0
    %215 = vmatpush1.bf16.msra.mxu0 0
    %216 = vmatprep.mubr.bf16.mxu0 0
    %217 = vmatmul.mubr.bf16.gmra.mrb[0].mxu0 %v119
    %v218 = vpop.f32.mrb[0].mxu0
    %v219 = vadd.f32 0.0, %v218
    %v220 = vpop.f32.mrb[0].mxu0
    %v221 = vpop.f32.mrb[0].mxu0
    %v222 = vadd.f32 0.0, %v221
    %v223 = vpop.f32.mrb[0].mxu0
    %224 = vdwg.mxu0
    %v225 = vadd.f32 %v166, %v219
    %v226 = vadd.f32 %v167, %v222
    %227 = vst.msk [vmem:[#allocation3] sm:$0xff] %vm117, %v225
    %228 = vst.msk [vmem:[#allocation3 + $0x8] sm:$0xff] %vm117, %v226
    %v229 = vld [vmem:[#allocation4] sm:$0xff]
    %v230 = vld [vmem:[#allocation4 + $0x8] sm:$0xff]
    %v231 = vld [vmem:[#allocation10] sm:$0xf]
    %v232 = vld [vmem:[#allocation10 + $0x4] sm:$0xf]
    %v233 = vld [vmem:[#allocation10 + $0x8] sm:$0xf]
    %v234 = vld [vmem:[#allocation10 + $0xc] sm:$0xf]
    %v239 = vunpack.c.l.b16 %v231
    %v240 = vunpack.c.l.b16 %v232
    %v241 = vunpack.c.l.b16 %v233
    %v242 = vunpack.c.l.b16 %v234
    %v243 = vpack.c.b16 %v240, %v239
    %v244 = vpack.c.b16 %v242, %v241
    %247 = vmatprep.subr.bf16.mxu0 0
    %248 = vmatpush1.bf16.msra.mxu0 %v243
    %249 = vmatprep.subr.bf16.mxu0 0
    %250 = vmatpush1.bf16.msra.mxu0 %v244
    %251 = vmatprep.subr.bf16.mxu0 0
    %252 = vmatpush1.bf16.msra.mxu0 0
    %253 = vmatprep.subr.bf16.mxu0 0
    %254 = vmatpush1.bf16.msra.mxu0 0
    %255 = vmatprep.subr.bf16.mxu0 0
    %256 = vmatpush1.bf16.msra.mxu0 0
    %257 = vmatprep.subr.bf16.mxu0 0
    %258 = vmatpush1.bf16.msra.mxu0 0
    %259 = vmatprep.subr.bf16.mxu0 0
    %260 = vmatpush1.bf16.msra.mxu0 0
    %261 = vmatprep.subr.bf16.mxu0 0
    %262 = vmatpush1.bf16.msra.mxu0 0
    %263 = vmatprep.subr.bf16.mxu0 0
    %264 = vmatpush1.bf16.msra.mxu0 0
    %265 = vmatprep.subr.bf16.mxu0 0
    %266 = vmatpush1.bf16.msra.mxu0 0
    %267 = vmatprep.subr.bf16.mxu0 0
    %268 = vmatpush1.bf16.msra.mxu0 0
    %269 = vmatprep.subr.bf16.mxu0 0
    %270 = vmatpush1.bf16.msra.mxu0 0
    %271 = vmatprep.subr.bf16.mxu0 0
    %272 = vmatpush1.bf16.msra.mxu0 0
    %273 = vmatprep.subr.bf16.mxu0 0
    %274 = vmatpush1.bf16.msra.mxu0 0
    %275 = vmatprep.subr.bf16.mxu0 0
    %276 = vmatpush1.bf16.msra.mxu0 0
    %277 = vmatprep.subr.bf16.mxu0 0
    %278 = vmatpush1.bf16.msra.mxu0 0
    %279 = vmatprep.mubr.bf16.mxu0 0
    %280 = vmatmul.mubr.bf16.gmra.mrb[0].mxu0 %v119
    %v281 = vpop.f32.mrb[0].mxu0
    %v282 = vadd.f32 0.0, %v281
    %v283 = vpop.f32.mrb[0].mxu0
    %v284 = vpop.f32.mrb[0].mxu0
    %v285 = vadd.f32 0.0, %v284
    %v286 = vpop.f32.mrb[0].mxu0
    %287 = vdwg.mxu0
    %v288 = vadd.f32 %v229, %v282
    %v289 = vadd.f32 %v230, %v285
    %290 = vst.msk [vmem:[#allocation4] sm:$0xff] %vm117, %v288
    %291 = vst.msk [vmem:[#allocation4 + $0x8] sm:$0xff] %vm117, %v289
    // Predicated region
    $region50: #{tpu_custom_call.1} parent=1 // pred_check
      %p292 = pneg %p85
    $region51: #{tpu_custom_call.1} parent=1 // pred_check_branch
      %294 = sbr.rel (%p292) target = $region53
    $region52: #{tpu_custom_call.1} parent=1 // pred_region
      %v295 = vld [vmem:[#allocation2] sm:$0xff]
      %v296 = vld [vmem:[#allocation2 + $0x8] sm:$0xff]
      %v297 = vld [vmem:[%s4] sm:$0x1]
      %v299 = vlaneseq
      %v300 = vshrl.u32 %v299, 7
      %v301 = vsub.s32 0, %v300
      %v302 = vrot.slane %v297, %v301
      %v304 = vadd.f32 %v295, %v302
      %v305 = vadd.f32 %v296, %v302
      %v306 = vpack.c.bf16 %v305, %v304
      %v308 = vunpack.c.l.b16 %v306
      %v309 = vunpack.c.h.b16 %v306
      %v310 = vpack.c.b16 %v308, %v308
      %v311 = vpack.c.b16 %v309, %v309
      %vm314 = vcmask 60416
      %315 = vst.msk [vmem:[%s7] sm:$0xf] %vm314, %v310
      %316 = vst.msk [vmem:[%s7 + $0x4] sm:$0xf] %vm314, %v311
      %317 = vrot.lane.b32.xlu0 %v310, 120
      %v318 = vpop.permute.xlu0 %317
      %319 = vrot.lane.b32.xlu0 %v311, 120
      %v320 = vpop.permute.xlu0 %319
      %s323 = scalar_lea.vmem %s7, 8
      %324 = vst.msk [vmem:[%s323] sm:$0xf] %vm314, %v318
      %325 = vst.msk [vmem:[%s323 + $0x4] sm:$0xf] %vm314, %v320
      %326 = vrot.lane.b32.xlu0 %v310, 112
      %v327 = vpop.permute.xlu0 %326
      %328 = vrot.lane.b32.xlu0 %v311, 112
      %v329 = vpop.permute.xlu0 %328
      %s332 = scalar_lea.vmem %s7, 16
      %333 = vst.msk [vmem:[%s332] sm:$0xf] %vm314, %v327
      %334 = vst.msk [vmem:[%s332 + $0x4] sm:$0xf] %vm314, %v329
      %335 = vrot.lane.b32.xlu0 %v310, 104
      %v336 = vpop.permute.xlu0 %335
      %337 = vrot.lane.b32.xlu0 %v311, 104
      %v338 = vpop.permute.xlu0 %337
      %s341 = scalar_lea.vmem %s7, 24
      %342 = vst.msk [vmem:[%s341] sm:$0xf] %vm314, %v336
      %343 = vst.msk [vmem:[%s341 + $0x4] sm:$0xf] %vm314, %v338
      %v344 = vld [vmem:[#allocation3] sm:$0xff]
      %v345 = vld [vmem:[#allocation3 + $0x8] sm:$0xff]
      %v346 = vld [vmem:[%s5] sm:$0x1]
      %v348 = vlaneseq
      %v349 = vshrl.u32 %v348, 7
      %v350 = vsub.s32 0, %v349
      %v351 = vrot.slane %v346, %v350
      %v353 = vadd.f32 %v344, %v351
      %v354 = vadd.f32 %v345, %v351
      %v355 = vpack.c.bf16 %v354, %v353
      %v357 = vunpack.c.l.b16 %v355
      %v358 = vunpack.c.h.b16 %v355
      %v359 = vpack.c.b16 %v357, %v357
      %v360 = vpack.c.b16 %v358, %v358
      %363 = vst.msk [vmem:[%s8] sm:$0xf] %vm314, %v359
      %364 = vst.msk [vmem:[%s8 + $0x4] sm:$0xf] %vm314, %v360
      %365 = vrot.lane.b32.xlu0 %v359, 120
      %v366 = vpop.permute.xlu0 %365
      %367 = vrot.lane.b32.xlu0 %v360, 120
      %v368 = vpop.permute.xlu0 %367
      %s371 = scalar_lea.vmem %s8, 8
      %372 = vst.msk [vmem:[%s371] sm:$0xf] %vm314, %v366
      %373 = vst.msk [vmem:[%s371 + $0x4] sm:$0xf] %vm314, %v368
      %374 = vrot.lane.b32.xlu0 %v359, 112
      %v375 = vpop.permute.xlu0 %374
      %376 = vrot.lane.b32.xlu0 %v360, 112
      %v377 = vpop.permute.xlu0 %376
      %s380 = scalar_lea.vmem %s8, 16
      %381 = vst.msk [vmem:[%s380] sm:$0xf] %vm314, %v375
      %382 = vst.msk [vmem:[%s380 + $0x4] sm:$0xf] %vm314, %v377
      %383 = vrot.lane.b32.xlu0 %v359, 104
      %v384 = vpop.permute.xlu0 %383
      %385 = vrot.lane.b32.xlu0 %v360, 104
      %v386 = vpop.permute.xlu0 %385
      %s389 = scalar_lea.vmem %s8, 24
      %390 = vst.msk [vmem:[%s389] sm:$0xf] %vm314, %v384
      %391 = vst.msk [vmem:[%s389 + $0x4] sm:$0xf] %vm314, %v386
      %v392 = vld [vmem:[#allocation4] sm:$0xff]
      %v393 = vld [vmem:[#allocation4 + $0x8] sm:$0xff]
      %v394 = vld [vmem:[%s6] sm:$0x1]
      %v396 = vlaneseq
      %v397 = vshrl.u32 %v396, 7
      %v398 = vsub.s32 0, %v397
      %v399 = vrot.slane %v394, %v398
      %v401 = vadd.f32 %v392, %v399
      %v402 = vadd.f32 %v393, %v399
      %v403 = vpack.c.bf16 %v402, %v401
      %v405 = vunpack.c.l.b16 %v403
      %v406 = vunpack.c.h.b16 %v403
      %v407 = vpack.c.b16 %v405, %v405
      %v408 = vpack.c.b16 %v406, %v406
      %411 = vst.msk [vmem:[%s9] sm:$0xf] %vm314, %v407
      %412 = vst.msk [vmem:[%s9 + $0x4] sm:$0xf] %vm314, %v408
      %413 = vrot.lane.b32.xlu0 %v407, 120
      %v414 = vpop.permute.xlu0 %413
      %415 = vrot.lane.b32.xlu0 %v408, 120
      %v416 = vpop.permute.xlu0 %415
      %s419 = scalar_lea.vmem %s9, 8
      %420 = vst.msk [vmem:[%s419] sm:$0xf] %vm314, %v414
      %421 = vst.msk [vmem:[%s419 + $0x4] sm:$0xf] %vm314, %v416
      %422 = vrot.lane.b32.xlu0 %v407, 112
      %v423 = vpop.permute.xlu0 %422
      %424 = vrot.lane.b32.xlu0 %v408, 112
      %v425 = vpop.permute.xlu0 %424
      %s428 = scalar_lea.vmem %s9, 16
      %429 = vst.msk [vmem:[%s428] sm:$0xf] %vm314, %v423
      %430 = vst.msk [vmem:[%s428 + $0x4] sm:$0xf] %vm314, %v425
      %431 = vrot.lane.b32.xlu0 %v407, 104
      %v432 = vpop.permute.xlu0 %431
      %433 = vrot.lane.b32.xlu0 %v408, 104
      %v434 = vpop.permute.xlu0 %433
      %s437 = scalar_lea.vmem %s9, 24
      %438 = vst.msk [vmem:[%s437] sm:$0xf] %vm314, %v432
      %439 = vst.msk [vmem:[%s437 + $0x4] sm:$0xf] %vm314, %v434
    $region53: #{tpu_custom_call.1} parent=1 // pred_fallthru
      _
    // Predicated region
    $region54: #{tpu_custom_call.1} parent=1 // pred_check
      _
    $region55: #{tpu_custom_call.1} parent=1 // pred_check_branch
      %441 = sbr.rel (0) target = $region57
    $region56: #{tpu_custom_call.1} parent=1 // pred_region
      _
    $region57: #{tpu_custom_call.1} parent=1 // pred_fallthru
      _
    // Predicated region
    $region58: #{tpu_custom_call.1} parent=1 // pred_check
      _
    $region59: #{tpu_custom_call.1} parent=1 // pred_check_branch
      %443 = sbr.rel (0) target = $region61
    $region60: #{tpu_custom_call.1} parent=1 // pred_region
      _
    $region61: #{tpu_custom_call.1} parent=1 // pred_fallthru
      _
    // Predicated region
    $region62: #{tpu_custom_call.1} parent=1 // pred_check
      _
    $region63: #{tpu_custom_call.1} parent=1 // pred_check_branch
      %445 = sbr.rel (0) target = $region65
    $region64: #{tpu_custom_call.1} parent=1 // pred_region
      _
    $region65: #{tpu_custom_call.1} parent=1 // pred_fallthru
      _
    // Predicated region
    $region66: #{tpu_custom_call.1} parent=1 // pred_check
      _
    $region67: #{tpu_custom_call.1} parent=1 // pred_check_branch
      %447 = sbr.rel (0) target = $region69
    $region68: #{tpu_custom_call.1} parent=1 // pred_region
      _
    $region69: #{tpu_custom_call.1} parent=1 // pred_fallthru
      _
    // Predicated region
    $region70: #{tpu_custom_call.1} parent=1 // pred_check
      _
    $region71: #{tpu_custom_call.1} parent=1 // pred_check_branch
      %449 = sbr.rel (0) target = $region73
    $region72: #{tpu_custom_call.1} parent=1 // pred_region
      _
    $region73: #{tpu_custom_call.1} parent=1 // pred_fallthru
      _
    // Predicated region
    $region74: #{tpu_custom_call.1} parent=1 // pred_check
      _
    $region75: #{tpu_custom_call.1} parent=1 // pred_check_branch
      %451 = sbr.rel (0) target = $region77
    $region76: #{tpu_custom_call.1} parent=1 // pred_region
      _
    $region77: #{tpu_custom_call.1} parent=1 // pred_fallthru
      _
    %452 = vsyncpa [#allocation6], 1
    %453 = vsyncpa [#allocation8], 1
    %454 = vsyncpa [#allocation11], 1

</llo_original>
